<compile_context>
chip_gen: v7x
topology: tpu7x:2x2x1
jax: 0.10.0
libtpu: 0.0.40
codegen_flags: <defaults>
</compile_context>

<pallas_src>
import jax
import jax.numpy as jnp
from jax.experimental import pallas as pl
from jax.experimental.pallas import tpu as pltpu


def dipol_gen_kernel(z_ref, w1_ref, b1_ref, w2_ref, b2_ref,
                     wx_ref, bx_ref, wa_ref, ba_ref, mx_ref, ma_ref,
                     x_out_ref, adj_out_ref):
    """Fused generator trunk + heads + lane-dense temperature softmax.

    z_ref, w*_ref are bf16 (MXU inputs); biases, group-sum masks and all
    elementwise math are f32.  1/dem is already folded into wx/bx/wa/ba.
    """
    z = z_ref[...]                                                # bf16 [TB, z]

    # --- feed-forward trunk: bf16 MXU matmuls, f32 accumulate, f32 tanh ---
    h1 = jnp.tanh(jnp.dot(z, w1_ref[...],
                          preferred_element_type=jnp.float32) + b1_ref[...])
    h2 = jnp.tanh(jnp.dot(h1.astype(jnp.bfloat16), w2_ref[...],
                          preferred_element_type=jnp.float32) + b2_ref[...])
    h2b = h2.astype(jnp.bfloat16)

    # --- heads (already temperature-scaled), kept flat / lane-dense ---
    x_logits = jnp.dot(h2b, wx_ref[...],
                       preferred_element_type=jnp.float32) + bx_ref[...]   # [TB, n*d]
    a_logits = jnp.dot(h2b, wa_ref[...],
                       preferred_element_type=jnp.float32) + ba_ref[...]   # [TB, n*n*r]

    def _segmented_softmax(logits, mask_ref):
        # Stabilize with the per-row max: it is constant within every softmax
        # group, so the result is mathematically identical to per-group-max
        # stabilization (and safe for the logit ranges this MLP produces).
        m = jnp.max(logits, axis=-1, keepdims=True)
        e = jnp.exp(logits - m)
        # Per-group sums broadcast back to every lane of the group via a
        # block-diagonal 0/1 matmul (f32, exact) -- no relayout needed.
        denom = jnp.dot(e, mask_ref[...], preferred_element_type=jnp.float32)
        return e * pl.reciprocal(denom, approx=True)

    x_out_ref[...] = _segmented_softmax(x_logits, mx_ref)
    adj_out_ref[...] = _segmented_softmax(a_logits, ma_ref)


def dipol_gen_forward(z, params, *, n_dim, d_dim, r_dim, dem=1.0,
                      batch_tile=128):
    """Wrapper: param prep (1/dem fold, bf16 cast), gridded pallas_call,
    reshape of the flat lane-dense outputs to [B,n,d] / [B,n,n,r]."""
    B, z_dim = z.shape
    w1, b1, w2, b2, wx, bx, wa, ba = params
    inv_dem = jnp.float32(1.0 / float(dem))

    # Fold the temperature into the head parameters; cast matmul inputs to
    # bf16 (f32 accumulation inside the kernel), keep biases f32.
    zb = z.astype(jnp.bfloat16)
    w1b = w1.astype(jnp.bfloat16)
    w2b = w2.astype(jnp.bfloat16)
    wxb = (wx * inv_dem).astype(jnp.bfloat16)
    wab = (wa * inv_dem).astype(jnp.bfloat16)
    b1f = b1.astype(jnp.float32)
    b2f = b2.astype(jnp.float32)
    bxf = (bx * inv_dem).astype(jnp.float32)
    baf = (ba * inv_dem).astype(jnp.float32)

    nd = n_dim * d_dim
    nnr = n_dim * n_dim * r_dim

    # Block-diagonal 0/1 "group sum" matrices for the lane-dense segmented
    # softmax (groups of size d_dim / r_dim are contiguous in the flat layout).
    mx = jnp.kron(jnp.eye(n_dim, dtype=jnp.float32),
                  jnp.ones((d_dim, d_dim), jnp.float32))            # [n*d, n*d]
    ma = jnp.kron(jnp.eye(n_dim * n_dim, dtype=jnp.float32),
                  jnp.ones((r_dim, r_dim), jnp.float32))            # [n*n*r, n*n*r]

    # Batch grid: TB rows per step, weights replicated (index_map -> (0,0)).
    TB = B if B <= batch_tile else batch_tile
    grid = (pl.cdiv(B, TB),)

    def _rep(shape):
        return pl.BlockSpec(shape, lambda i: (0, 0))

    in_specs = [
        pl.BlockSpec((TB, z_dim), lambda i: (i, 0)),     # z
        _rep((z_dim, w1b.shape[1])),                     # w1
        _rep((1, b1f.shape[1])),                         # b1
        _rep((w2b.shape[0], w2b.shape[1])),              # w2
        _rep((1, b2f.shape[1])),                         # b2
        _rep((wxb.shape[0], nd)),                        # wx (scaled)
        _rep((1, nd)),                                   # bx (scaled)
        _rep((wab.shape[0], nnr)),                       # wa (scaled)
        _rep((1, nnr)),                                  # ba (scaled)
        _rep((nd, nd)),                                  # x group-sum mask
        _rep((nnr, nnr)),                                # adj group-sum mask
    ]
    out_specs = (
        pl.BlockSpec((TB, nd), lambda i: (i, 0)),
        pl.BlockSpec((TB, nnr), lambda i: (i, 0)),
    )

    # TODO(synk): for large n_dim, additionally tile the adjacency head along
    # its output columns (tile a multiple of n_dim*r_dim) so wa and the adj
    # output fit v7x's 64 MiB VMEM.
    x_flat, adj_flat = pl.pallas_call(
        dipol_gen_kernel,
        out_shape=(
            jax.ShapeDtypeStruct((B, nd), jnp.float32),
            jax.ShapeDtypeStruct((B, nnr), jnp.float32),
        ),
        grid=grid,
        in_specs=in_specs,
        out_specs=out_specs,
        compiler_params=pltpu.CompilerParams(
            dimension_semantics=("parallel",),
            vmem_limit_bytes=32 * 1024 * 1024,
        ),
    )(zb, w1b, b1f, w2b, b2f, wxb, bxf, wab, baf, mx, ma)

    x = x_flat.reshape(B, n_dim, d_dim)
    rel_adj = adj_flat.reshape(B, n_dim, n_dim, r_dim)
    return x, rel_adj
    # TODO(synk): catsamp='gumbel' / 'hard_gumbel' branches (F.gumbel_softmax)
    # need in-kernel PRNG (pltpu.prng_seed + prng_random_bits); not implemented.


def init_params(key, z_dim, hidden, n_dim, d_dim, r_dim):
    """Deterministic synthetic generator parameters (no checkpoint load)."""
    ks = jax.random.split(key, 8)
    s = 0.1
    w1 = jax.random.normal(ks[0], (z_dim, hidden), jnp.float32) * s
    b1 = jax.random.normal(ks[1], (1, hidden), jnp.float32) * s
    w2 = jax.random.normal(ks[2], (hidden, hidden), jnp.float32) * s
    b2 = jax.random.normal(ks[3], (1, hidden), jnp.float32) * s
    wx = jax.random.normal(ks[4], (hidden, n_dim * d_dim), jnp.float32) * s
    bx = jax.random.normal(ks[5], (1, n_dim * d_dim), jnp.float32) * s
    wa = jax.random.normal(ks[6], (hidden, n_dim * n_dim * r_dim), jnp.float32) * s
    ba = jax.random.normal(ks[7], (1, n_dim * n_dim * r_dim), jnp.float32) * s
    return (w1, b1, w2, b2, wx, bx, wa, ba)


def _reference_forward(z, params, *, n_dim, d_dim, r_dim, dem=1.0):
    """Pure-JAX (f32) reference matching the PyTorch semantics."""
    w1, b1, w2, b2, wx, bx, wa, ba = params
    h1 = jnp.tanh(z @ w1 + b1)
    h2 = jnp.tanh(h1 @ w2 + b2)
    B = z.shape[0]
    x_logits = (h2 @ wx + bx).reshape(B, n_dim, d_dim)
    a_logits = (h2 @ wa + ba).reshape(B, n_dim, n_dim, r_dim)
    x = jax.nn.softmax(x_logits / dem, axis=-1)
    rel_adj = jax.nn.softmax(a_logits / dem, axis=-1)
    return x, rel_adj


if __name__ == "__main__":
    # Small shapes consistent with the module: d_dim = atom types, r_dim =
    # bond (relation) types, n_dim = graph nodes, z_dim = latent dim.
    B, z_dim, hidden = 2, 32, 64
    n_dim, d_dim, r_dim = 8, 5, 4
    dem = 0.75   # non-trivial temperature to exercise the 1/dem folding

    key = jax.random.PRNGKey(0)
    k_z, k_p = jax.random.split(key)
    z = jax.random.normal(k_z, (B, z_dim), jnp.float32)
    params = init_params(k_p, z_dim, hidden, n_dim, d_dim, r_dim)

    x, rel_adj = dipol_gen_forward(z, params, n_dim=n_dim, d_dim=d_dim,
                                   r_dim=r_dim, dem=dem)
    jax.block_until_ready((x, rel_adj))

    x_ref, adj_ref = _reference_forward(z, params, n_dim=n_dim, d_dim=d_dim,
                                        r_dim=r_dim, dem=dem)
    assert x.shape == (B, n_dim, d_dim)
    assert rel_adj.shape == (B, n_dim, n_dim, r_dim)
    # bf16 matmul inputs + approx reciprocal -> relaxed tolerances vs f32 ref.
    assert jnp.allclose(x, x_ref, atol=1e-2, rtol=1e-2)
    assert jnp.allclose(rel_adj, adj_ref, atol=1e-2, rtol=1e-2)
    # softmax rows must sum to ~1 (exact group sums; approx reciprocal only)
    assert jnp.allclose(jnp.sum(x, -1), 1.0, atol=1e-2)
    assert jnp.allclose(jnp.sum(rel_adj, -1), 1.0, atol=1e-2)

    print("KERNEL_OK")
</pallas_src>

<mosaic_0001>
module attributes {stable_mosaic.version = 11 : i64} {
  func.func @dipol_gen_kernel(%arg0: i32, %arg1: memref<2x32xbf16, #tpu.memory_space<vmem>>, %arg2: memref<32x64xbf16, #tpu.memory_space<vmem>>, %arg3: memref<1x64xf32, #tpu.memory_space<vmem>>, %arg4: memref<64x64xbf16, #tpu.memory_space<vmem>>, %arg5: memref<1x64xf32, #tpu.memory_space<vmem>>, %arg6: memref<64x40xbf16, #tpu.memory_space<vmem>>, %arg7: memref<1x40xf32, #tpu.memory_space<vmem>>, %arg8: memref<64x256xbf16, #tpu.memory_space<vmem>>, %arg9: memref<1x256xf32, #tpu.memory_space<vmem>>, %arg10: memref<40x40xf32, #tpu.memory_space<vmem>>, %arg11: memref<256x256xf32, #tpu.memory_space<vmem>>, %arg12: memref<2x40xf32, #tpu.memory_space<vmem>>, %arg13: memref<2x256xf32, #tpu.memory_space<vmem>>) attributes {dimension_semantics = [#tpu.dimension_semantics<parallel>], iteration_bounds = array<i64: 1>, scalar_prefetch = 0 : i64, scratch_operands = 0 : i64, tpu.core_type = #tpu.core_type<tc>, window_params = [{transform_indices = @transform_0, window_bounds = array<i64: 2, 32>}, {pipeline_mode = #tpu.pipeline_mode<synchronous>, transform_indices = @transform_1, window_bounds = array<i64: 32, 64>}, {pipeline_mode = #tpu.pipeline_mode<synchronous>, transform_indices = @transform_2, window_bounds = array<i64: 1, 64>}, {pipeline_mode = #tpu.pipeline_mode<synchronous>, transform_indices = @transform_3, window_bounds = array<i64: 64, 64>}, {pipeline_mode = #tpu.pipeline_mode<synchronous>, transform_indices = @transform_4, window_bounds = array<i64: 1, 64>}, {pipeline_mode = #tpu.pipeline_mode<synchronous>, transform_indices = @transform_5, window_bounds = array<i64: 64, 40>}, {pipeline_mode = #tpu.pipeline_mode<synchronous>, transform_indices = @transform_6, window_bounds = array<i64: 1, 40>}, {pipeline_mode = #tpu.pipeline_mode<synchronous>, transform_indices = @transform_7, window_bounds = array<i64: 64, 256>}, {pipeline_mode = #tpu.pipeline_mode<synchronous>, transform_indices = @transform_8, window_bounds = array<i64: 1, 256>}, {pipeline_mode = #tpu.pipeline_mode<synchronous>, transform_indices = @transform_9, window_bounds = array<i64: 40, 40>}, {pipeline_mode = #tpu.pipeline_mode<synchronous>, transform_indices = @transform_10, window_bounds = array<i64: 256, 256>}, {transform_indices = @transform_11, window_bounds = array<i64: 2, 40>}, {transform_indices = @transform_12, window_bounds = array<i64: 2, 256>}]} {
    %c0 = arith.constant 0 : index
    %c0_0 = arith.constant 0 : index
    %0 = vector.load %arg1[%c0, %c0_0] : memref<2x32xbf16, #tpu.memory_space<vmem>>, vector<2x32xbf16>
    %c0_1 = arith.constant 0 : index
    %c0_2 = arith.constant 0 : index
    %1 = vector.load %arg2[%c0_1, %c0_2] : memref<32x64xbf16, #tpu.memory_space<vmem>>, vector<32x64xbf16>
    %cst = arith.constant dense<0.000000e+00> : vector<2x64xf32>
    %2 = tpu.matmul %0, %1, %cst {dimension_numbers = #tpu.dot_dimension_numbers<[1], [0], [0], [1], [0, 0, 1, 1], [], []>} : vector<2x32xbf16>, vector<32x64xbf16>, vector<2x64xf32> -> vector<2x64xf32>
    %c0_3 = arith.constant 0 : index
    %c0_4 = arith.constant 0 : index
    %3 = vector.load %arg3[%c0_3, %c0_4] : memref<1x64xf32, #tpu.memory_space<vmem>>, vector<1x64xf32>
    %4 = vector.broadcast %3 : vector<1x64xf32> to vector<2x64xf32>
    %5 = arith.addf %2, %4 : vector<2x64xf32>
    %6 = math.tanh %5 : vector<2x64xf32>
    %7 = arith.truncf %6 : vector<2x64xf32> to vector<2x64xbf16>
    %c0_5 = arith.constant 0 : index
    %c0_6 = arith.constant 0 : index
    %8 = vector.load %arg4[%c0_5, %c0_6] : memref<64x64xbf16, #tpu.memory_space<vmem>>, vector<64x64xbf16>
    %cst_7 = arith.constant dense<0.000000e+00> : vector<2x64xf32>
    %9 = tpu.matmul %7, %8, %cst_7 {dimension_numbers = #tpu.dot_dimension_numbers<[1], [0], [0], [1], [0, 0, 1, 1], [], []>} : vector<2x64xbf16>, vector<64x64xbf16>, vector<2x64xf32> -> vector<2x64xf32>
    %c0_8 = arith.constant 0 : index
    %c0_9 = arith.constant 0 : index
    %10 = vector.load %arg5[%c0_8, %c0_9] : memref<1x64xf32, #tpu.memory_space<vmem>>, vector<1x64xf32>
    %11 = vector.broadcast %10 : vector<1x64xf32> to vector<2x64xf32>
    %12 = arith.addf %9, %11 : vector<2x64xf32>
    %13 = math.tanh %12 : vector<2x64xf32>
    %14 = arith.truncf %13 : vector<2x64xf32> to vector<2x64xbf16>
    %c0_10 = arith.constant 0 : index
    %c0_11 = arith.constant 0 : index
    %15 = vector.load %arg6[%c0_10, %c0_11] : memref<64x40xbf16, #tpu.memory_space<vmem>>, vector<64x40xbf16>
    %cst_12 = arith.constant dense<0.000000e+00> : vector<2x40xf32>
    %16 = tpu.matmul %14, %15, %cst_12 {dimension_numbers = #tpu.dot_dimension_numbers<[1], [0], [0], [1], [0, 0, 1, 1], [], []>} : vector<2x64xbf16>, vector<64x40xbf16>, vector<2x40xf32> -> vector<2x40xf32>
    %c0_13 = arith.constant 0 : index
    %c0_14 = arith.constant 0 : index
    %17 = vector.load %arg7[%c0_13, %c0_14] : memref<1x40xf32, #tpu.memory_space<vmem>>, vector<1x40xf32>
    %18 = vector.broadcast %17 : vector<1x40xf32> to vector<2x40xf32>
    %19 = arith.addf %16, %18 : vector<2x40xf32>
    %c0_15 = arith.constant 0 : index
    %c0_16 = arith.constant 0 : index
    %20 = vector.load %arg8[%c0_15, %c0_16] : memref<64x256xbf16, #tpu.memory_space<vmem>>, vector<64x256xbf16>
    %cst_17 = arith.constant dense<0.000000e+00> : vector<2x256xf32>
    %21 = tpu.matmul %14, %20, %cst_17 {dimension_numbers = #tpu.dot_dimension_numbers<[1], [0], [0], [1], [0, 0, 1, 1], [], []>} : vector<2x64xbf16>, vector<64x256xbf16>, vector<2x256xf32> -> vector<2x256xf32>
    %c0_18 = arith.constant 0 : index
    %c0_19 = arith.constant 0 : index
    %22 = vector.load %arg9[%c0_18, %c0_19] : memref<1x256xf32, #tpu.memory_space<vmem>>, vector<1x256xf32>
    %23 = vector.broadcast %22 : vector<1x256xf32> to vector<2x256xf32>
    %24 = arith.addf %21, %23 : vector<2x256xf32>
    %cst_20 = arith.constant dense<0xFF800000> : vector<2xf32>
    %25 = vector.multi_reduction <maximumf>, %19, %cst_20 [1] : vector<2x40xf32> to vector<2xf32>
    %26 = vector.shape_cast %25 : vector<2xf32> to vector<2x1xf32>
    %27 = vector.broadcast %26 : vector<2x1xf32> to vector<2x40xf32>
    %28 = arith.subf %19, %27 : vector<2x40xf32>
    %29 = math.exp %28 : vector<2x40xf32>
    %c0_21 = arith.constant 0 : index
    %c0_22 = arith.constant 0 : index
    %30 = vector.load %arg10[%c0_21, %c0_22] : memref<40x40xf32, #tpu.memory_space<vmem>>, vector<40x40xf32>
    %cst_23 = arith.constant dense<0.000000e+00> : vector<2x40xf32>
    %31 = tpu.matmul %29, %30, %cst_23 {dimension_numbers = #tpu.dot_dimension_numbers<[1], [0], [0], [1], [0, 0, 1, 1], [], []>} : vector<2x40xf32>, vector<40x40xf32>, vector<2x40xf32> -> vector<2x40xf32>
    %32 = tpu.reciprocal %31 {approx = true} : vector<2x40xf32> -> vector<2x40xf32>
    %33 = arith.mulf %29, %32 : vector<2x40xf32>
    %c0_24 = arith.constant 0 : index
    %c0_25 = arith.constant 0 : index
    %34 = vector.load %arg12[%c0_24, %c0_25] : memref<2x40xf32, #tpu.memory_space<vmem>>, vector<2x40xf32>
    tpu.vector_store %arg12[%c0_24, %c0_25], %33 {strides = array<i32>} : memref<2x40xf32, #tpu.memory_space<vmem>>, vector<2x40xf32>,
    %cst_26 = arith.constant dense<0xFF800000> : vector<2xf32>
    %35 = vector.multi_reduction <maximumf>, %24, %cst_26 [1] : vector<2x256xf32> to vector<2xf32>
    %36 = vector.shape_cast %35 : vector<2xf32> to vector<2x1xf32>
    %37 = vector.broadcast %36 : vector<2x1xf32> to vector<2x256xf32>
    %38 = arith.subf %24, %37 : vector<2x256xf32>
    %39 = math.exp %38 : vector<2x256xf32>
    %c0_27 = arith.constant 0 : index
    %c0_28 = arith.constant 0 : index
    %40 = vector.load %arg11[%c0_27, %c0_28] : memref<256x256xf32, #tpu.memory_space<vmem>>, vector<256x256xf32>
    %cst_29 = arith.constant dense<0.000000e+00> : vector<2x256xf32>
    %41 = tpu.matmul %39, %40, %cst_29 {dimension_numbers = #tpu.dot_dimension_numbers<[1], [0], [0], [1], [0, 0, 1, 1], [], []>} : vector<2x256xf32>, vector<256x256xf32>, vector<2x256xf32> -> vector<2x256xf32>
    %42 = tpu.reciprocal %41 {approx = true} : vector<2x256xf32> -> vector<2x256xf32>
    %43 = arith.mulf %39, %42 : vector<2x256xf32>
    %c0_30 = arith.constant 0 : index
    %c0_31 = arith.constant 0 : index
    %44 = vector.load %arg13[%c0_30, %c0_31] : memref<2x256xf32, #tpu.memory_space<vmem>>, vector<2x256xf32>
    tpu.vector_store %arg13[%c0_30, %c0_31], %43 {strides = array<i32>} : memref<2x256xf32, #tpu.memory_space<vmem>>, vector<2x256xf32>,
    return
  }
  func.func @transform_0(%arg0: i32) -> (i32, i32) {
    %c0_i32 = arith.constant 0 : i32
    %c0_i32_0 = arith.constant 0 : i32
    return %arg0, %c0_i32 : i32, i32
  }
  func.func @transform_1(%arg0: i32) -> (i32, i32) {
    %c0_i32 = arith.constant 0 : i32
    %c0_i32_0 = arith.constant 0 : i32
    %c0_i32_1 = arith.constant 0 : i32
    return %c0_i32, %c0_i32_0 : i32, i32
  }
  func.func @transform_2(%arg0: i32) -> (i32, i32) {
    %c0_i32 = arith.constant 0 : i32
    %c0_i32_0 = arith.constant 0 : i32
    %c0_i32_1 = arith.constant 0 : i32
    return %c0_i32, %c0_i32_0 : i32, i32
  }
  func.func @transform_3(%arg0: i32) -> (i32, i32) {
    %c0_i32 = arith.constant 0 : i32
    %c0_i32_0 = arith.constant 0 : i32
    %c0_i32_1 = arith.constant 0 : i32
    return %c0_i32, %c0_i32_0 : i32, i32
  }
  func.func @transform_4(%arg0: i32) -> (i32, i32) {
    %c0_i32 = arith.constant 0 : i32
    %c0_i32_0 = arith.constant 0 : i32
    %c0_i32_1 = arith.constant 0 : i32
    return %c0_i32, %c0_i32_0 : i32, i32
  }
  func.func @transform_5(%arg0: i32) -> (i32, i32) {
    %c0_i32 = arith.constant 0 : i32
    %c0_i32_0 = arith.constant 0 : i32
    %c0_i32_1 = arith.constant 0 : i32
    return %c0_i32, %c0_i32_0 : i32, i32
  }
  func.func @transform_6(%arg0: i32) -> (i32, i32) {
    %c0_i32 = arith.constant 0 : i32
    %c0_i32_0 = arith.constant 0 : i32
    %c0_i32_1 = arith.constant 0 : i32
    return %c0_i32, %c0_i32_0 : i32, i32
  }
  func.func @transform_7(%arg0: i32) -> (i32, i32) {
    %c0_i32 = arith.constant 0 : i32
    %c0_i32_0 = arith.constant 0 : i32
    %c0_i32_1 = arith.constant 0 : i32
    return %c0_i32, %c0_i32_0 : i32, i32
  }
  func.func @transform_8(%arg0: i32) -> (i32, i32) {
    %c0_i32 = arith.constant 0 : i32
    %c0_i32_0 = arith.constant 0 : i32
    %c0_i32_1 = arith.constant 0 : i32
    return %c0_i32, %c0_i32_0 : i32, i32
  }
  func.func @transform_9(%arg0: i32) -> (i32, i32) {
    %c0_i32 = arith.constant 0 : i32
    %c0_i32_0 = arith.constant 0 : i32
    %c0_i32_1 = arith.constant 0 : i32
    return %c0_i32, %c0_i32_0 : i32, i32
  }
  func.func @transform_10(%arg0: i32) -> (i32, i32) {
    %c0_i32 = arith.constant 0 : i32
    %c0_i32_0 = arith.constant 0 : i32
    %c0_i32_1 = arith.constant 0 : i32
    return %c0_i32, %c0_i32_0 : i32, i32
  }
  func.func @transform_11(%arg0: i32) -> (i32, i32) {
    %c0_i32 = arith.constant 0 : i32
    %c0_i32_0 = arith.constant 0 : i32
    return %arg0, %c0_i32 : i32, i32
  }
  func.func @transform_12(%arg0: i32) -> (i32, i32) {
    %c0_i32 = arith.constant 0 : i32
    %c0_i32_0 = arith.constant 0 : i32
    return %arg0, %c0_i32 : i32, i32
  }
}

</mosaic_0001>

<llo_original>
// kernel: tpu_custom_call.1
$region0: #{tpu_custom_call.1}
  #allocation0 [shape = 'u32[]', space=smem, size = 0x4, offset = 0x4, fixed_abs, tag = 'smem constant byte address 0x4 - core index']
  #allocation1 [shape = 'u32[144,128]{1,0:T(1,128)}', space=vmem, size = 0x12000, scoped, tag = 'internal scratch']
  %s0 = inlined_call_operand.vmem [shape: bf16[2,32], index: 0, kind: input, shape index: {}]
  %s1 = inlined_call_operand.hbm [shape: bf16[32,64], index: 1, kind: input, shape index: {}]
  %s2 = inlined_call_operand.vmem [shape: f32[1,64], index: 2, kind: input, shape index: {}]
  %s3 = inlined_call_operand.hbm [shape: bf16[64,64], index: 3, kind: input, shape index: {}]
  %s4 = inlined_call_operand.vmem [shape: f32[1,64], index: 4, kind: input, shape index: {}]
  %s5 = inlined_call_operand.vmem [shape: bf16[64,40], index: 5, kind: input, shape index: {}]
  %s6 = inlined_call_operand.vmem [shape: f32[1,40], index: 6, kind: input, shape index: {}]
  %s7 = inlined_call_operand.vmem [shape: bf16[64,256], index: 7, kind: input, shape index: {}]
  %s8 = inlined_call_operand.vmem [shape: f32[1,256], index: 8, kind: input, shape index: {}]
  %s9 = inlined_call_operand.hbm [shape: f32[40,40], index: 9, kind: input, shape index: {}]
  %s10 = inlined_call_operand.hbm [shape: f32[256,256], index: 10, kind: input, shape index: {}]
  %s11 = inlined_call_operand.hbm [shape: f32[2,40], index: 11, kind: output, shape index: {0}]
  %s12 = inlined_call_operand.hbm [shape: f32[2,256], index: 12, kind: output, shape index: {1}]
  %13 = xla_tuple %s11, %s12
  %s14 = sld [smem:[#allocation0]]
  $region78: #{tpu_custom_call.1} parent=0
    _
  %s16 = ssub.s32 1, %s14
  %s17 = scalar_select 0, %s16, %s14
  $region1: #{tpu_custom_call.1} parent=0
    #allocation2 [shape = 'u8[8192]{0}', space=vmem, size = 0x2000, scoped, tag = 'input window, operand 1, single buffered']
    #allocation3 [shape = 's32[1]{0}', space=sflag, size = 0x4, scoped, tag = 'scoped memory for tpu_custom_call.1']
    #allocation4 [shape = 's32[1]{0}', space=sflag, size = 0x4, scoped, tag = 'scoped memory for tpu_custom_call.1']
    #allocation5 [shape = 'u8[16384]{0}', space=vmem, size = 0x4000, scoped, tag = 'input window, operand 3, single buffered']
    #allocation6 [shape = 's32[1]{0}', space=sflag, size = 0x4, scoped, tag = 'scoped memory for tpu_custom_call.1']
    #allocation7 [shape = 'u8[20480]{0}', space=vmem, size = 0x5000, scoped, tag = 'input window, operand 9, single buffered']
    #allocation8 [shape = 'u8[262144]{0}', space=vmem, size = 0x40000, scoped, tag = 'input window, operand 10, single buffered']
    #allocation9 [shape = 's32[1]{0}', space=sflag, size = 0x4, scoped, tag = 'scoped memory for tpu_custom_call.1']
    #allocation10 [shape = 'u8[1024]{0}', space=vmem, size = 0x400, scoped, tag = 'output window, operand 0, single buffered']
    #allocation11 [shape = 'u8[2048]{0}', space=vmem, size = 0x800, scoped, tag = 'output window, operand 1, single buffered']
    #allocation12 [shape = 's32[1]{0}', space=sflag, size = 0x4, scoped, tag = 'scoped memory for tpu_custom_call.1']
    %18 = vsyncpa [#allocation3], 0
    %19 = vsyncpa [#allocation6], 0
    %20 = vsyncpa [#allocation9], 0
    %21 = vsyncpa [#allocation4], 0
    %22 = vsyncpa [#allocation12], 0
    // Predicated region
    $region2: #{tpu_custom_call.1} parent=1 // pred_check
      _
    $region3: #{tpu_custom_call.1} parent=1 // pred_check_branch
      %24 = sbr.rel (0) target = $region5
    $region4: #{tpu_custom_call.1} parent=1 // pred_region
      _
    $region5: #{tpu_custom_call.1} parent=1 // pred_fallthru
      _
    // Predicated region
    $region6: #{tpu_custom_call.1} parent=1 // pred_check
      _
    $region7: #{tpu_custom_call.1} parent=1 // pred_check_branch
      %26 = sbr.rel (0) target = $region9
    $region8: #{tpu_custom_call.1} parent=1 // pred_region
      %s28 = ssub.s32 256, 256
      %29 = vsyncadd [#allocation3], %s28
      %s30 = sshll.u32 [#allocation2], 4
      %s31 = int_to_ptr.vmem [resolvable:$true] %s30
      %36 = dma.hbm_to_vmem [thread:$0]  %s1, 256, %s31, [#allocation3], 64, 64, 4
    $region9: #{tpu_custom_call.1} parent=1 // pred_fallthru
      _
    // Predicated region
    $region10: #{tpu_custom_call.1} parent=1 // pred_check
      _
    $region11: #{tpu_custom_call.1} parent=1 // pred_check_branch
      %38 = sbr.rel (0) target = $region13
    $region12: #{tpu_custom_call.1} parent=1 // pred_region
      _
    $region13: #{tpu_custom_call.1} parent=1 // pred_fallthru
      _
    // Predicated region
    $region14: #{tpu_custom_call.1} parent=1 // pred_check
      _
    $region15: #{tpu_custom_call.1} parent=1 // pred_check_branch
      %40 = sbr.rel (0) target = $region17
    $region16: #{tpu_custom_call.1} parent=1 // pred_region
      %s42 = ssub.s32 512, 512
      %43 = vsyncadd [#allocation6], %s42
      %s44 = sshll.u32 [#allocation5], 4
      %s45 = int_to_ptr.vmem [resolvable:$true] %s44
      %50 = dma.hbm_to_vmem [thread:$0]  %s3, 512, %s45, [#allocation6], 64, 64, 4
    $region17: #{tpu_custom_call.1} parent=1 // pred_fallthru
      _
    // Predicated region
    $region18: #{tpu_custom_call.1} parent=1 // pred_check
      _
    $region19: #{tpu_custom_call.1} parent=1 // pred_check_branch
      %52 = sbr.rel (0) target = $region21
    $region20: #{tpu_custom_call.1} parent=1 // pred_region
      _
    $region21: #{tpu_custom_call.1} parent=1 // pred_fallthru
      _
    // Predicated region
    $region22: #{tpu_custom_call.1} parent=1 // pred_check
      _
    $region23: #{tpu_custom_call.1} parent=1 // pred_check_branch
      %54 = sbr.rel (0) target = $region25
    $region24: #{tpu_custom_call.1} parent=1 // pred_region
      _
    $region25: #{tpu_custom_call.1} parent=1 // pred_fallthru
      _
    // Predicated region
    $region26: #{tpu_custom_call.1} parent=1 // pred_check
      _
    $region27: #{tpu_custom_call.1} parent=1 // pred_check_branch
      %56 = sbr.rel (0) target = $region29
    $region28: #{tpu_custom_call.1} parent=1 // pred_region
      _
    $region29: #{tpu_custom_call.1} parent=1 // pred_fallthru
      _
    // Predicated region
    $region30: #{tpu_custom_call.1} parent=1 // pred_check
      _
    $region31: #{tpu_custom_call.1} parent=1 // pred_check_branch
      %58 = sbr.rel (0) target = $region33
    $region32: #{tpu_custom_call.1} parent=1 // pred_region
      _
    $region33: #{tpu_custom_call.1} parent=1 // pred_fallthru
      _
    // Predicated region
    $region34: #{tpu_custom_call.1} parent=1 // pred_check
      _
    $region35: #{tpu_custom_call.1} parent=1 // pred_check_branch
      %60 = sbr.rel (0) target = $region37
    $region36: #{tpu_custom_call.1} parent=1 // pred_region
      _
    $region37: #{tpu_custom_call.1} parent=1 // pred_fallthru
      _
    // Predicated region
    $region38: #{tpu_custom_call.1} parent=1 // pred_check
      _
    $region39: #{tpu_custom_call.1} parent=1 // pred_check_branch
      %62 = sbr.rel (0) target = $region41
    $region40: #{tpu_custom_call.1} parent=1 // pred_region
      %s64 = ssub.s32 640, 640
      %65 = vsyncadd [#allocation6], %s64
      %s66 = sshll.u32 [#allocation7], 4
      %s67 = int_to_ptr.vmem [resolvable:$true] %s66
      %72 = dma.hbm_to_vmem [thread:$0]  %s9, 640, %s67, [#allocation6], 128, 128, 8
    $region41: #{tpu_custom_call.1} parent=1 // pred_fallthru
      _
    // Predicated region
    $region42: #{tpu_custom_call.1} parent=1 // pred_check
      _
    $region43: #{tpu_custom_call.1} parent=1 // pred_check_branch
      %74 = sbr.rel (0) target = $region45
    $region44: #{tpu_custom_call.1} parent=1 // pred_region
      %s76 = ssub.s32 8192, 8192
      %77 = vsyncadd [#allocation9], %s76
      %s78 = sshll.u32 [#allocation8], 4
      %s79 = int_to_ptr.vmem [resolvable:$true] %s78
      %84 = dma.hbm_to_vmem [thread:$0]  %s10, 8192, %s79, [#allocation9], 256, 256, 16
    $region45: #{tpu_custom_call.1} parent=1 // pred_fallthru
      _
    // Predicated region
    $region46: #{tpu_custom_call.1} parent=1 // pred_check
      _
    $region47: #{tpu_custom_call.1} parent=1 // pred_check_branch
      %86 = sbr.rel (0) target = $region49
    $region48: #{tpu_custom_call.1} parent=1 // pred_region
      %87 = dma.done [#allocation3], 256
    $region49: #{tpu_custom_call.1} parent=1 // pred_fallthru
      _
    // Predicated region
    $region50: #{tpu_custom_call.1} parent=1 // pred_check
      _
    $region51: #{tpu_custom_call.1} parent=1 // pred_check_branch
      %89 = sbr.rel (0) target = $region53
    $region52: #{tpu_custom_call.1} parent=1 // pred_region
      %90 = dma.done [#allocation6], 512
    $region53: #{tpu_custom_call.1} parent=1 // pred_fallthru
      _
    // Predicated region
    $region54: #{tpu_custom_call.1} parent=1 // pred_check
      _
    $region55: #{tpu_custom_call.1} parent=1 // pred_check_branch
      %92 = sbr.rel (0) target = $region57
    $region56: #{tpu_custom_call.1} parent=1 // pred_region
      %93 = dma.done [#allocation6], 640
    $region57: #{tpu_custom_call.1} parent=1 // pred_fallthru
      _
    // Predicated region
    $region58: #{tpu_custom_call.1} parent=1 // pred_check
      _
    $region59: #{tpu_custom_call.1} parent=1 // pred_check_branch
      %95 = sbr.rel (0) target = $region61
    $region60: #{tpu_custom_call.1} parent=1 // pred_region
      %96 = dma.done [#allocation9], 8192
    $region61: #{tpu_custom_call.1} parent=1 // pred_fallthru
      _
    %v98 = vld [vmem:[%s0] sm:$0x1]
    %v99 = vld [vmem:[#allocation2] sm:$0xf]
    %v100 = vld [vmem:[#allocation2 + $0x4] sm:$0xf]
    %v101 = vld [vmem:[#allocation2 + $0x8] sm:$0xf]
    %v102 = vld [vmem:[#allocation2 + $0xc] sm:$0xf]
    %v103 = vld [vmem:[%s2] sm:$0x1]
    %v105 = vlaneseq
    %v106 = vshrl.u32 %v105, 7
    %v107 = vsub.s32 0, %v106
    %v108 = vrot.slane %v103, %v107
    %v114 = vunpack.c.l.b16 %v99
    %v115 = vunpack.c.l.b16 %v100
    %v116 = vunpack.c.l.b16 %v101
    %v117 = vunpack.c.l.b16 %v102
    %v118 = vpack.c.b16 %v115, %v114
    %v119 = vpack.c.b16 %v117, %v116
    %vm122 = vcmask 261120
    %v124 = vsel %vm122, %v98, 0
    %126 = vmatprep.subr.bf16.mxu0 0
    %127 = vmatpush1.bf16.msra.mxu0 %v118
    %128 = vmatprep.subr.bf16.mxu0 0
    %129 = vmatpush1.bf16.msra.mxu0 %v119
    %130 = vmatprep.subr.bf16.mxu0 0
    %131 = vmatpush1.bf16.msra.mxu0 0
    %132 = vmatprep.subr.bf16.mxu0 0
    %133 = vmatpush1.bf16.msra.mxu0 0
    %134 = vmatprep.subr.bf16.mxu0 0
    %135 = vmatpush1.bf16.msra.mxu0 0
    %136 = vmatprep.subr.bf16.mxu0 0
    %137 = vmatpush1.bf16.msra.mxu0 0
    %138 = vmatprep.subr.bf16.mxu0 0
    %139 = vmatpush1.bf16.msra.mxu0 0
    %140 = vmatprep.subr.bf16.mxu0 0
    %141 = vmatpush1.bf16.msra.mxu0 0
    %142 = vmatprep.subr.bf16.mxu0 0
    %143 = vmatpush1.bf16.msra.mxu0 0
    %144 = vmatprep.subr.bf16.mxu0 0
    %145 = vmatpush1.bf16.msra.mxu0 0
    %146 = vmatprep.subr.bf16.mxu0 0
    %147 = vmatpush1.bf16.msra.mxu0 0
    %148 = vmatprep.subr.bf16.mxu0 0
    %149 = vmatpush1.bf16.msra.mxu0 0
    %150 = vmatprep.subr.bf16.mxu0 0
    %151 = vmatpush1.bf16.msra.mxu0 0
    %152 = vmatprep.subr.bf16.mxu0 0
    %153 = vmatpush1.bf16.msra.mxu0 0
    %154 = vmatprep.subr.bf16.mxu0 0
    %155 = vmatpush1.bf16.msra.mxu0 0
    %156 = vmatprep.subr.bf16.mxu0 0
    %157 = vmatpush1.bf16.msra.mxu0 0
    %158 = vmatprep.mubr.bf16.mxu0 0
    %159 = vmatmul.mubr.bf16.gmra.mrb[0].mxu0 %v124
    %v160 = vpop.f32.mrb[0].mxu0
    %v161 = vadd.f32 %v108, %v160
    %v162 = vpop.f32.mrb[0].mxu0
    %v163 = vpop.f32.mrb[0].mxu0
    %v164 = vpop.f32.mrb[0].mxu0
    %165 = vdwg.mxu0
    %v166 = vtanh.pop %v161
    %v167 = vpack.c.bf16 %v166, %v166
    %v168 = vld [vmem:[#allocation5] sm:$0xf]
    %v169 = vld [vmem:[#allocation5 + $0x4] sm:$0xf]
    %v170 = vld [vmem:[#allocation5 + $0x8] sm:$0xf]
    %v171 = vld [vmem:[#allocation5 + $0xc] sm:$0xf]
    %v172 = vld [vmem:[#allocation5 + $0x10] sm:$0xf]
    %v173 = vld [vmem:[#allocation5 + $0x14] sm:$0xf]
    %v174 = vld [vmem:[#allocation5 + $0x18] sm:$0xf]
    %v175 = vld [vmem:[#allocation5 + $0x1c] sm:$0xf]
    %v176 = vld [vmem:[%s4] sm:$0x1]
    %v178 = vlaneseq
    %v179 = vshrl.u32 %v178, 7
    %v180 = vsub.s32 0, %v179
    %v181 = vrot.slane %v176, %v180
    %v191 = vunpack.c.l.b16 %v168
    %v192 = vunpack.c.l.b16 %v169
    %v193 = vunpack.c.l.b16 %v170
    %v194 = vunpack.c.l.b16 %v171
    %v195 = vunpack.c.l.b16 %v172
    %v196 = vunpack.c.l.b16 %v173
    %v197 = vunpack.c.l.b16 %v174
    %v198 = vunpack.c.l.b16 %v175
    %v199 = vpack.c.b16 %v192, %v191
    %v200 = vpack.c.b16 %v194, %v193
    %v201 = vpack.c.b16 %v196, %v195
    %v202 = vpack.c.b16 %v198, %v197
    %vm207 = vcmask 523264
    %v209 = vsel %vm207, %v167, 0
    %211 = vmatprep.subr.bf16.mxu0 0
    %212 = vmatpush1.bf16.msra.mxu0 %v199
    %213 = vmatprep.subr.bf16.mxu0 0
    %214 = vmatpush1.bf16.msra.mxu0 %v200
    %215 = vmatprep.subr.bf16.mxu0 0
    %216 = vmatpush1.bf16.msra.mxu0 %v201
    %217 = vmatprep.subr.bf16.mxu0 0
    %218 = vmatpush1.bf16.msra.mxu0 %v202
    %219 = vmatprep.subr.bf16.mxu0 0
    %220 = vmatpush1.bf16.msra.mxu0 0
    %221 = vmatprep.subr.bf16.mxu0 0
    %222 = vmatpush1.bf16.msra.mxu0 0
    %223 = vmatprep.subr.bf16.mxu0 0
    %224 = vmatpush1.bf16.msra.mxu0 0
    %225 = vmatprep.subr.bf16.mxu0 0
    %226 = vmatpush1.bf16.msra.mxu0 0
    %227 = vmatprep.subr.bf16.mxu0 0
    %228 = vmatpush1.bf16.msra.mxu0 0
    %229 = vmatprep.subr.bf16.mxu0 0
    %230 = vmatpush1.bf16.msra.mxu0 0
    %231 = vmatprep.subr.bf16.mxu0 0
    %232 = vmatpush1.bf16.msra.mxu0 0
    %233 = vmatprep.subr.bf16.mxu0 0
    %234 = vmatpush1.bf16.msra.mxu0 0
    %235 = vmatprep.subr.bf16.mxu0 0
    %236 = vmatpush1.bf16.msra.mxu0 0
    %237 = vmatprep.subr.bf16.mxu0 0
    %238 = vmatpush1.bf16.msra.mxu0 0
    %239 = vmatprep.subr.bf16.mxu0 0
    %240 = vmatpush1.bf16.msra.mxu0 0
    %241 = vmatprep.subr.bf16.mxu0 0
    %242 = vmatpush1.bf16.msra.mxu0 0
    %243 = vmatprep.mubr.bf16.mxu0 0
    %244 = vmatmul.mubr.bf16.gmra.mrb[0].mxu0 %v209
    %v245 = vpop.f32.mrb[0].mxu0
    %v246 = vadd.f32 %v181, %v245
    %v247 = vpop.f32.mrb[0].mxu0
    %v248 = vpop.f32.mrb[0].mxu0
    %v249 = vpop.f32.mrb[0].mxu0
    %250 = vdwg.mxu0
    %v251 = vtanh.pop %v246
    %v252 = vpack.c.bf16 %v251, %v251
    %v253 = vld [vmem:[%s5] sm:$0xf]
    %v254 = vld [vmem:[%s5 + $0x4] sm:$0xf]
    %v255 = vld [vmem:[%s5 + $0x8] sm:$0xf]
    %v256 = vld [vmem:[%s5 + $0xc] sm:$0xf]
    %v257 = vld [vmem:[%s5 + $0x10] sm:$0xf]
    %v258 = vld [vmem:[%s5 + $0x14] sm:$0xf]
    %v259 = vld [vmem:[%s5 + $0x18] sm:$0xf]
    %v260 = vld [vmem:[%s5 + $0x1c] sm:$0xf]
    %v261 = vld [vmem:[%s6] sm:$0x1]
    %v263 = vlaneseq
    %v264 = vshrl.u32 %v263, 7
    %v265 = vsub.s32 0, %v264
    %v266 = vrot.slane %v261, %v265
    %v276 = vunpack.c.l.b16 %v253
    %v277 = vunpack.c.l.b16 %v254
    %v278 = vunpack.c.l.b16 %v255
    %v279 = vunpack.c.l.b16 %v256
    %v280 = vunpack.c.l.b16 %v257
    %v281 = vunpack.c.l.b16 %v258
    %v282 = vunpack.c.l.b16 %v259
    %v283 = vunpack.c.l.b16 %v260
    %v284 = vpack.c.b16 %v277, %v276
    %v285 = vpack.c.b16 %v279, %v278
    %v286 = vpack.c.b16 %v281, %v280
    %v287 = vpack.c.b16 %v283, %v282
    %v293 = vsel %vm207, %v252, 0
    %295 = vmatprep.subr.bf16.mxu0 0
    %296 = vmatpush1.bf16.msra.mxu0 %v284
    %297 = vmatprep.subr.bf16.mxu0 0
    %298 = vmatpush1.bf16.msra.mxu0 %v285
    %299 = vmatprep.subr.bf16.mxu0 0
    %300 = vmatpush1.bf16.msra.mxu0 %v286
    %301 = vmatprep.subr.bf16.mxu0 0
    %302 = vmatpush1.bf16.msra.mxu0 %v287
    %303 = vmatprep.subr.bf16.mxu0 0
    %304 = vmatpush1.bf16.msra.mxu0 0
    %305 = vmatprep.subr.bf16.mxu0 0
    %306 = vmatpush1.bf16.msra.mxu0 0
    %307 = vmatprep.subr.bf16.mxu0 0
    %308 = vmatpush1.bf16.msra.mxu0 0
    %309 = vmatprep.subr.bf16.mxu0 0
    %310 = vmatpush1.bf16.msra.mxu0 0
    %311 = vmatprep.subr.bf16.mxu0 0
    %312 = vmatpush1.bf16.msra.mxu0 0
    %313 = vmatprep.subr.bf16.mxu0 0
    %314 = vmatpush1.bf16.msra.mxu0 0
    %315 = vmatprep.subr.bf16.mxu0 0
    %316 = vmatpush1.bf16.msra.mxu0 0
    %317 = vmatprep.subr.bf16.mxu0 0
    %318 = vmatpush1.bf16.msra.mxu0 0
    %319 = vmatprep.subr.bf16.mxu0 0
    %320 = vmatpush1.bf16.msra.mxu0 0
    %321 = vmatprep.subr.bf16.mxu0 0
    %322 = vmatpush1.bf16.msra.mxu0 0
    %323 = vmatprep.subr.bf16.mxu0 0
    %324 = vmatpush1.bf16.msra.mxu0 0
    %325 = vmatprep.subr.bf16.mxu0 0
    %326 = vmatpush1.bf16.msra.mxu0 0
    %327 = vmatprep.mubr.bf16.mxu0 0
    %328 = vmatmul.mubr.bf16.gmra.mrb[0].mxu0 %v293
    %v329 = vpop.f32.mrb[0].mxu0
    %v330 = vadd.f32 %v266, %v329
    %v331 = vpop.f32.mrb[0].mxu0
    %v332 = vpop.f32.mrb[0].mxu0
    %v333 = vpop.f32.mrb[0].mxu0
    %334 = vdwg.mxu0
    %v335 = vld [vmem:[%s7] sm:$0xff]
    %v336 = vld [vmem:[%s7 + $0x8] sm:$0xff]
    %v337 = vld [vmem:[%s7 + $0x10] sm:$0xff]
    %v338 = vld [vmem:[%s7 + $0x18] sm:$0xff]
    %v339 = vld [vmem:[%s7 + $0x20] sm:$0xff]
    %v340 = vld [vmem:[%s7 + $0x28] sm:$0xff]
    %v341 = vld [vmem:[%s7 + $0x30] sm:$0xff]
    %v342 = vld [vmem:[%s7 + $0x38] sm:$0xff]
    %v343 = vld [vmem:[%s8] sm:$0x3]
    %v345 = vlaneseq
    %v346 = vshrl.u32 %v345, 7
    %v347 = vsub.s32 0, %v346
    %v348 = vrot.slane %v343, %v347
    %v349 = vlaneseq
    %v350 = vshrl.u32 %v349, 7
    %v351 = vsub.s32 1, %v350
    %v352 = vrot.slane %v343, %v351
    %v363 = vunpack.c.l.b16 %v335
    %v364 = vunpack.c.h.b16 %v335
    %v365 = vunpack.c.l.b16 %v336
    %v366 = vunpack.c.h.b16 %v336
    %v367 = vunpack.c.l.b16 %v337
    %v368 = vunpack.c.h.b16 %v337
    %v369 = vunpack.c.l.b16 %v338
    %v370 = vunpack.c.h.b16 %v338
    %v371 = vunpack.c.l.b16 %v339
    %v372 = vunpack.c.h.b16 %v339
    %v373 = vunpack.c.l.b16 %v340
    %v374 = vunpack.c.h.b16 %v340
    %v375 = vunpack.c.l.b16 %v341
    %v376 = vunpack.c.h.b16 %v341
    %v377 = vunpack.c.l.b16 %v342
    %v378 = vunpack.c.h.b16 %v342
    %v379 = vpack.c.b16 %v365, %v363
    %v380 = vpack.c.b16 %v366, %v364
    %v381 = vpack.c.b16 %v369, %v367
    %v382 = vpack.c.b16 %v370, %v368
    %v383 = vpack.c.b16 %v373, %v371
    %v384 = vpack.c.b16 %v374, %v372
    %v385 = vpack.c.b16 %v377, %v375
    %v386 = vpack.c.b16 %v378, %v376
    %395 = vmatprep.subr.bf16.mxu0 %v380
    %396 = vmatpush1.bf16.msra.mxu0 %v379
    %397 = vmatprep.subr.bf16.mxu0 %v382
    %398 = vmatpush1.bf16.msra.mxu0 %v381
    %399 = vmatprep.subr.bf16.mxu0 %v384
    %400 = vmatpush1.bf16.msra.mxu0 %v383
    %401 = vmatprep.subr.bf16.mxu0 %v386
    %402 = vmatpush1.bf16.msra.mxu0 %v385
    %403 = vmatprep.subr.bf16.mxu0 0
    %404 = vmatpush1.bf16.msra.mxu0 0
    %405 = vmatprep.subr.bf16.mxu0 0
    %406 = vmatpush1.bf16.msra.mxu0 0
    %407 = vmatprep.subr.bf16.mxu0 0
    %408 = vmatpush1.bf16.msra.mxu0 0
    %409 = vmatprep.subr.bf16.mxu0 0
    %410 = vmatpush1.bf16.msra.mxu0 0
    %411 = vmatprep.subr.bf16.mxu0 0
    %412 = vmatpush1.bf16.msra.mxu0 0
    %413 = vmatprep.subr.bf16.mxu0 0
    %414 = vmatpush1.bf16.msra.mxu0 0
    %415 = vmatprep.subr.bf16.mxu0 0
    %416 = vmatpush1.bf16.msra.mxu0 0
    %417 = vmatprep.subr.bf16.mxu0 0
    %418 = vmatpush1.bf16.msra.mxu0 0
    %419 = vmatprep.subr.bf16.mxu0 0
    %420 = vmatpush1.bf16.msra.mxu0 0
    %421 = vmatprep.subr.bf16.mxu0 0
    %422 = vmatpush1.bf16.msra.mxu0 0
    %423 = vmatprep.subr.bf16.mxu0 0
    %424 = vmatpush1.bf16.msra.mxu0 0
    %425 = vmatprep.subr.bf16.mxu0 0
    %426 = vmatpush1.bf16.msra.mxu0 0
    %427 = vmatprep.mubr.bf16.mxu0 0
    %428 = vmatmul.mubr.bf16.gmra.mrb[0].mxu0 %v293
    %v429 = vpop.f32.mrb[0].mxu0
    %v430 = vadd.f32 %v348, %v429
    %v431 = vpop.f32.mrb[0].mxu0
    %v432 = vadd.f32 %v352, %v431
    %v433 = vpop.f32.mrb[0].mxu0
    %v434 = vpop.f32.mrb[0].mxu0
    %435 = vdwg.mxu0
    %vm436 = vcmask 320512
    %v437 = vsel %vm436, %v330, -inf
    %438 = vmax.xlane.f32.xlu0 %v437
    %v439 = vpop.xlane.xlu0 %438
    %v440 = vsub.f32 %v330, %v439
    %v441 = vmul.f32 %v440, 1.442695
    %v442 = vpow.pop %v441
    %v443 = vld [vmem:[#allocation7] sm:$0xff]
    %v444 = vld [vmem:[#allocation7 + $0x8] sm:$0xff]
    %v445 = vld [vmem:[#allocation7 + $0x10] sm:$0xff]
    %v446 = vld [vmem:[#allocation7 + $0x18] sm:$0xff]
    %v447 = vld [vmem:[#allocation7 + $0x20] sm:$0xff]
    %vm448 = vcmask 326656
    %v450 = vsel %vm448, %v442, 0
    %452 = vmatprep.subr.mxu0 0.0
    %453 = vmatpush1.msra.mxu0 %v443
    %454 = vmatprep.subr.mxu0 0.0
    %455 = vmatpush1.msra.mxu0 %v444
    %456 = vmatprep.subr.mxu0 0.0
    %457 = vmatpush1.msra.mxu0 %v445
    %458 = vmatprep.subr.mxu0 0.0
    %459 = vmatpush1.msra.mxu0 %v446
    %460 = vmatprep.subr.mxu0 0.0
    %461 = vmatpush1.msra.mxu0 %v447
    %462 = vmatprep.subr.mxu0 0.0
    %463 = vmatpush1.msra.mxu0 0.0
    %464 = vmatprep.subr.mxu0 0.0
    %465 = vmatpush1.msra.mxu0 0.0
    %466 = vmatprep.subr.mxu0 0.0
    %467 = vmatpush1.msra.mxu0 0.0
    %468 = vmatprep.subr.mxu0 0.0
    %469 = vmatpush1.msra.mxu0 0.0
    %470 = vmatprep.subr.mxu0 0.0
    %471 = vmatpush1.msra.mxu0 0.0
    %472 = vmatprep.subr.mxu0 0.0
    %473 = vmatpush1.msra.mxu0 0.0
    %474 = vmatprep.subr.mxu0 0.0
    %475 = vmatpush1.msra.mxu0 0.0
    %476 = vmatprep.subr.mxu0 0.0
    %477 = vmatpush1.msra.mxu0 0.0
    %478 = vmatprep.subr.mxu0 0.0
    %479 = vmatpush1.msra.mxu0 0.0
    %480 = vmatprep.subr.mxu0 0.0
    %481 = vmatpush1.msra.mxu0 0.0
    %482 = vmatprep.subr.mxu0 0.0
    %483 = vmatpush1.msra.mxu0 0.0
    %484 = vmatprep.subr.mxu0 0.0
    %485 = vmatpush1.msra.mxu0 0.0
    %486 = vmatprep.subr.mxu0 0.0
    %487 = vmatpush1.msra.mxu0 0.0
    %488 = vmatprep.subr.mxu0 0.0
    %489 = vmatpush1.msra.mxu0 0.0
    %490 = vmatprep.subr.mxu0 0.0
    %491 = vmatpush1.msra.mxu0 0.0
    %492 = vmatprep.subr.mxu0 0.0
    %493 = vmatpush1.msra.mxu0 0.0
    %494 = vmatprep.subr.mxu0 0.0
    %495 = vmatpush1.msra.mxu0 0.0
    %496 = vmatprep.subr.mxu0 0.0
    %497 = vmatpush1.msra.mxu0 0.0
    %498 = vmatprep.subr.mxu0 0.0
    %499 = vmatpush1.msra.mxu0 0.0
    %500 = vmatprep.subr.mxu0 0.0
    %501 = vmatpush1.msra.mxu0 0.0
    %502 = vmatprep.subr.mxu0 0.0
    %503 = vmatpush1.msra.mxu0 0.0
    %504 = vmatprep.subr.mxu0 0.0
    %505 = vmatpush1.msra.mxu0 0.0
    %506 = vmatprep.subr.mxu0 0.0
    %507 = vmatpush1.msra.mxu0 0.0
    %508 = vmatprep.subr.mxu0 0.0
    %509 = vmatpush1.msra.mxu0 0.0
    %510 = vmatprep.subr.mxu0 0.0
    %511 = vmatpush1.msra.mxu0 0.0
    %512 = vmatprep.subr.mxu0 0.0
    %513 = vmatpush1.msra.mxu0 0.0
    %514 = vmatprep.subr.mxu0 0.0
    %515 = vmatpush1.msra.mxu0 0.0
    %516 = vmatprep.mubr.f32.mxu0 0.0
    %517 = vmatmul.mubr.f32.gmra.mrb[0].mxu0 %v450
    %v518 = vpop.f32.mrb[0].mxu0
    %v519 = vadd.f32 0.0, %v518
    %v520 = vpop.f32.mrb[0].mxu0
    %521 = vdwg.mxu0
    %v522 = vrcp.pop %v519
    %v523 = vmul.f32 %v442, %v522
    %524 = vst.msk [vmem:[#allocation10] sm:$0x3] %vm436, %v523
    %vm525 = vcmask 1041408
    %v526 = vsel %vm525, %v430, -inf
    %v527 = vsel %vm525, %v432, -inf
    %v528 = vmax.f32 %v526, %v527
    %529 = vmax.xlane.f32.xlu0 %v528
    %v530 = vpop.xlane.xlu0 %529
    %v531 = vsub.f32 %v430, %v530
    %v532 = vsub.f32 %v432, %v530
    %v533 = vmul.f32 %v531, 1.442695
    %v534 = vpow.pop %v533
    %v535 = vmul.f32 %v532, 1.442695
    %v536 = vpow.pop %v535
    %v537 = vld [vmem:[#allocation8] sm:$0xff]
    %v538 = vld [vmem:[#allocation8 + $0x8] sm:$0xff]
    %v539 = vld [vmem:[#allocation8 + $0x10] sm:$0xff]
    %v540 = vld [vmem:[#allocation8 + $0x18] sm:$0xff]
    %v541 = vld [vmem:[#allocation8 + $0x20] sm:$0xff]
    %v542 = vld [vmem:[#allocation8 + $0x28] sm:$0xff]
    %v543 = vld [vmem:[#allocation8 + $0x30] sm:$0xff]
    %v544 = vld [vmem:[#allocation8 + $0x38] sm:$0xff]
    %v545 = vld [vmem:[#allocation8 + $0x40] sm:$0xff]
    %v546 = vld [vmem:[#allocation8 + $0x48] sm:$0xff]
    %v547 = vld [vmem:[#allocation8 + $0x50] sm:$0xff]
    %v548 = vld [vmem:[#allocation8 + $0x58] sm:$0xff]
    %v549 = vld [vmem:[#allocation8 + $0x60] sm:$0xff]
    %v550 = vld [vmem:[#allocation8 + $0x68] sm:$0xff]
    %v551 = vld [vmem:[#allocation8 + $0x70] sm:$0xff]
    %v552 = vld [vmem:[#allocation8 + $0x78] sm:$0xff]
    %v553 = vld [vmem:[#allocation8 + $0x80] sm:$0xff]
    %v554 = vld [vmem:[#allocation8 + $0x88] sm:$0xff]
    %v555 = vld [vmem:[#allocation8 + $0x90] sm:$0xff]
    %v556 = vld [vmem:[#allocation8 + $0x98] sm:$0xff]
    %v557 = vld [vmem:[#allocation8 + $0xa0] sm:$0xff]
    %v558 = vld [vmem:[#allocation8 + $0xa8] sm:$0xff]
    %v559 = vld [vmem:[#allocation8 + $0xb0] sm:$0xff]
    %v560 = vld [vmem:[#allocation8 + $0xb8] sm:$0xff]
    %v561 = vld [vmem:[#allocation8 + $0xc0] sm:$0xff]
    %v562 = vld [vmem:[#allocation8 + $0xc8] sm:$0xff]
    %v563 = vld [vmem:[#allocation8 + $0xd0] sm:$0xff]
    %v564 = vld [vmem:[#allocation8 + $0xd8] sm:$0xff]
    %v565 = vld [vmem:[#allocation8 + $0xe0] sm:$0xff]
    %v566 = vld [vmem:[#allocation8 + $0xe8] sm:$0xff]
    %v567 = vld [vmem:[#allocation8 + $0xf0] sm:$0xff]
    %v568 = vld [vmem:[#allocation8 + $0xf8] sm:$0xff]
    %v569 = vld [vmem:[#allocation8 + $0x100] sm:$0xff]
    %v570 = vld [vmem:[#allocation8 + $0x108] sm:$0xff]
    %v571 = vld [vmem:[#allocation8 + $0x110] sm:$0xff]
    %v572 = vld [vmem:[#allocation8 + $0x118] sm:$0xff]
    %v573 = vld [vmem:[#allocation8 + $0x120] sm:$0xff]
    %v574 = vld [vmem:[#allocation8 + $0x128] sm:$0xff]
    %v575 = vld [vmem:[#allocation8 + $0x130] sm:$0xff]
    %v576 = vld [vmem:[#allocation8 + $0x138] sm:$0xff]
    %v577 = vld [vmem:[#allocation8 + $0x140] sm:$0xff]
    %v578 = vld [vmem:[#allocation8 + $0x148] sm:$0xff]
    %v579 = vld [vmem:[#allocation8 + $0x150] sm:$0xff]
    %v580 = vld [vmem:[#allocation8 + $0x158] sm:$0xff]
    %v581 = vld [vmem:[#allocation8 + $0x160] sm:$0xff]
    %v582 = vld [vmem:[#allocation8 + $0x168] sm:$0xff]
    %v583 = vld [vmem:[#allocation8 + $0x170] sm:$0xff]
    %v584 = vld [vmem:[#allocation8 + $0x178] sm:$0xff]
    %v585 = vld [vmem:[#allocation8 + $0x180] sm:$0xff]
    %v586 = vld [vmem:[#allocation8 + $0x188] sm:$0xff]
    %v587 = vld [vmem:[#allocation8 + $0x190] sm:$0xff]
    %v588 = vld [vmem:[#allocation8 + $0x198] sm:$0xff]
    %v589 = vld [vmem:[#allocation8 + $0x1a0] sm:$0xff]
    %v590 = vld [vmem:[#allocation8 + $0x1a8] sm:$0xff]
    %v591 = vld [vmem:[#allocation8 + $0x1b0] sm:$0xff]
    %v592 = vld [vmem:[#allocation8 + $0x1b8] sm:$0xff]
    %v593 = vld [vmem:[#allocation8 + $0x1c0] sm:$0xff]
    %v594 = vld [vmem:[#allocation8 + $0x1c8] sm:$0xff]
    %v595 = vld [vmem:[#allocation8 + $0x1d0] sm:$0xff]
    %v596 = vld [vmem:[#allocation8 + $0x1d8] sm:$0xff]
    %v597 = vld [vmem:[#allocation8 + $0x1e0] sm:$0xff]
    %v598 = vld [vmem:[#allocation8 + $0x1e8] sm:$0xff]
    %v599 = vld [vmem:[#allocation8 + $0x1f0] sm:$0xff]
    %v600 = vld [vmem:[#allocation8 + $0x1f8] sm:$0xff]
    %601 = vmatprep.subr.mxu0 %v538
    %602 = vmatpush1.msra.mxu0 %v537
    %603 = vmatprep.subr.mxu0 %v540
    %604 = vmatpush1.msra.mxu0 %v539
    %605 = vmatprep.subr.mxu0 %v542
    %606 = vmatpush1.msra.mxu0 %v541
    %607 = vmatprep.subr.mxu0 %v544
    %608 = vmatpush1.msra.mxu0 %v543
    %609 = vmatprep.subr.mxu0 %v546
    %610 = vmatpush1.msra.mxu0 %v545
    %611 = vmatprep.subr.mxu0 %v548
    %612 = vmatpush1.msra.mxu0 %v547
    %613 = vmatprep.subr.mxu0 %v550
    %614 = vmatpush1.msra.mxu0 %v549
    %615 = vmatprep.subr.mxu0 %v552
    %616 = vmatpush1.msra.mxu0 %v551
    %617 = vmatprep.subr.mxu0 %v554
    %618 = vmatpush1.msra.mxu0 %v553
    %619 = vmatprep.subr.mxu0 %v556
    %620 = vmatpush1.msra.mxu0 %v555
    %621 = vmatprep.subr.mxu0 %v558
    %622 = vmatpush1.msra.mxu0 %v557
    %623 = vmatprep.subr.mxu0 %v560
    %624 = vmatpush1.msra.mxu0 %v559
    %625 = vmatprep.subr.mxu0 %v562
    %626 = vmatpush1.msra.mxu0 %v561
    %627 = vmatprep.subr.mxu0 %v564
    %628 = vmatpush1.msra.mxu0 %v563
    %629 = vmatprep.subr.mxu0 %v566
    %630 = vmatpush1.msra.mxu0 %v565
    %631 = vmatprep.subr.mxu0 %v568
    %632 = vmatpush1.msra.mxu0 %v567
    %633 = vmatprep.subr.mxu0 %v570
    %634 = vmatpush1.msra.mxu0 %v569
    %635 = vmatprep.subr.mxu0 %v572
    %636 = vmatpush1.msra.mxu0 %v571
    %637 = vmatprep.subr.mxu0 %v574
    %638 = vmatpush1.msra.mxu0 %v573
    %639 = vmatprep.subr.mxu0 %v576
    %640 = vmatpush1.msra.mxu0 %v575
    %641 = vmatprep.subr.mxu0 %v578
    %642 = vmatpush1.msra.mxu0 %v577
    %643 = vmatprep.subr.mxu0 %v580
    %644 = vmatpush1.msra.mxu0 %v579
    %645 = vmatprep.subr.mxu0 %v582
    %646 = vmatpush1.msra.mxu0 %v581
    %647 = vmatprep.subr.mxu0 %v584
    %648 = vmatpush1.msra.mxu0 %v583
    %649 = vmatprep.subr.mxu0 %v586
    %650 = vmatpush1.msra.mxu0 %v585
    %651 = vmatprep.subr.mxu0 %v588
    %652 = vmatpush1.msra.mxu0 %v587
    %653 = vmatprep.subr.mxu0 %v590
    %654 = vmatpush1.msra.mxu0 %v589
    %655 = vmatprep.subr.mxu0 %v592
    %656 = vmatpush1.msra.mxu0 %v591
    %657 = vmatprep.subr.mxu0 %v594
    %658 = vmatpush1.msra.mxu0 %v593
    %659 = vmatprep.subr.mxu0 %v596
    %660 = vmatpush1.msra.mxu0 %v595
    %661 = vmatprep.subr.mxu0 %v598
    %662 = vmatpush1.msra.mxu0 %v597
    %663 = vmatprep.subr.mxu0 %v600
    %664 = vmatpush1.msra.mxu0 %v599
    %665 = vmatprep.mubr.f32.mxu0 %v536
    %666 = vmatmul.mubr.f32.gmra.mrb[0].mxu0 %v534
    %v667 = vpop.f32.mrb[0].mxu0
    %v668 = vadd.f32 0.0, %v667
    %v669 = vpop.f32.mrb[0].mxu0
    %v670 = vadd.f32 0.0, %v669
    %671 = vdwg.mxu0
    %v672 = vrcp.pop %v668
    %v673 = vrcp.pop %v670
    %v674 = vmul.f32 %v534, %v672
    %v675 = vmul.f32 %v536, %v673
    %v678 = vcombine.low %v674, %v675
    %v680 = vunpack.c.l.s4 1983009808
    %v681 = vunpack.c.0.s8 %v680
    %v682 = vlaneseq
    %v683 = vshrl.u32 %v682, 7
    %v684 = vsub.s32 %v681, %v683
    %v685 = vrot.slane %v678, %v684
    %687 = vst [vmem:[#allocation11] sm:$0xf] %v685
    // Predicated region
    $region62: #{tpu_custom_call.1} parent=1 // pred_check
      _
    $region63: #{tpu_custom_call.1} parent=1 // pred_check_branch
      %689 = sbr.rel (0) target = $region65
    $region64: #{tpu_custom_call.1} parent=1 // pred_region
      %s691 = ssub.s32 32, 32
      %692 = vsyncadd [#allocation4], %s691
      %s694 = sshll.u32 [#allocation10], 4
      %s695 = int_to_ptr.vmem [resolvable:$true] %s694
      %697 = dma.vmem_to_hbm [thread:$0]  %s695, 32, %s11, [#allocation4]
    $region65: #{tpu_custom_call.1} parent=1 // pred_fallthru
      _
    // Predicated region
    $region66: #{tpu_custom_call.1} parent=1 // pred_check
      _
    $region67: #{tpu_custom_call.1} parent=1 // pred_check_branch
      %699 = sbr.rel (0) target = $region69
    $region68: #{tpu_custom_call.1} parent=1 // pred_region
      %s701 = ssub.s32 64, 64
      %702 = vsyncadd [#allocation12], %s701
      %s704 = sshll.u32 [#allocation11], 4
      %s705 = int_to_ptr.vmem [resolvable:$true] %s704
      %707 = dma.vmem_to_hbm [thread:$0]  %s705, 64, %s12, [#allocation12]
    $region69: #{tpu_custom_call.1} parent=1 // pred_fallthru
      _
    // Predicated region
    $region70: #{tpu_custom_call.1} parent=1 // pred_check
      _
    $region71: #{tpu_custom_call.1} parent=1 // pred_check_branch
      %709 = sbr.rel (0) target = $region73
    $region72: #{tpu_custom_call.1} parent=1 // pred_region
      %710 = dma.done [#allocation4], 32
    $region73: #{tpu_custom_call.1} parent=1 // pred_fallthru
      _
    // Predicated region
    $region74: #{tpu_custom_call.1} parent=1 // pred_check
      _
    $region75: #{tpu_custom_call.1} parent=1 // pred_check_branch
      %712 = sbr.rel (0) target = $region77
    $region76: #{tpu_custom_call.1} parent=1 // pred_region
      %713 = dma.done [#allocation12], 64
    $region77: #{tpu_custom_call.1} parent=1 // pred_fallthru
      _
    %714 = vsyncpa [#allocation3], 1
    %715 = vsyncpa [#allocation6], 1
    %716 = vsyncpa [#allocation9], 1
    %717 = vsyncpa [#allocation4], 1
    %718 = vsyncpa [#allocation12], 1

</llo_original>
